<compile_context>
chip_gen: v7x
topology: tpu7x:2x2x1
jax: 0.10.0
libtpu: 0.0.40
codegen_flags: <defaults>
</compile_context>

<pallas_src>
import functools

import jax
import jax.numpy as jnp
import numpy as np
from jax.experimental import pallas as pl
from jax.experimental.pallas import tpu as pltpu


def _scsa_kernel(x_ref, w1t_ref, w2_ref, wa_ref, wmask_ref, ws1_ref, out_ref,
                 *, W):
    """One batch block (Nb samples) per grid step.

    x_ref     : (Nb, C, S)  activations (native dtype), S = H*W
    w1t_ref   : (C, Cmid)   channel_wise conv1 weight, transposed
    w2_ref    : (C, Cmid)   channel_wise conv2 weight (torch layout)
    wa_ref    : (F, C)      attention_wise 1x1 conv weight
    wmask_ref : (9, S) f32  per-tap 3x3 weight * border-validity mask
    ws1_ref   : (1,) SMEM   spatial_wise 1x1 conv weight (scalar)
    out_ref   : (Nb, F, S)
    """
    x = x_ref[...].astype(jnp.float32)                       # (Nb, C, S)
    Nb, C, S = x.shape

    # ---- channel_wise: AdaptiveAvgPool2d(1) -> 1x1 -> ReLU -> 1x1 -> sigmoid
    pooled = jnp.mean(x, axis=2, keepdims=True)              # (Nb, C, 1)  lane reduce
    w1t = w1t_ref[...].astype(jnp.float32)                   # (C, Cmid)
    w2 = w2_ref[...].astype(jnp.float32)                     # (C, Cmid)
    h = jnp.sum(pooled * w1t[None, :, :], axis=1, keepdims=True)   # (Nb, 1, Cmid)
    h = jnp.maximum(h, 0.0)                                  # ReLU
    ch = jax.nn.sigmoid(
        jnp.sum(h * w2[None, :, :], axis=2, keepdims=True))  # (Nb, C, 1)

    # global_x = sigmoid(channel_wise(x)) + x
    g = x + ch                                               # (Nb, C, S)

    # ---- mean over channels (dim=1) ----------------------------------------
    m = jnp.mean(g, axis=1)                                  # (Nb, S)  sublane reduce

    # ---- spatial_wise: 3x3 conv (pad=1) -> ReLU -> 1x1 scalar -> sigmoid ----
    # Neighbour (i+a, j+b) of flat pixel f is flat offset d = a*W + b.
    # wmask[k] already contains w3[k] * border-validity (0/1), so each tap is
    # a single roll + FMA; wrapped roll positions are exactly where mask == 0.
    wmask = wmask_ref[...]                                   # (9, S) f32
    acc = wmask[4:5, :] * m                                  # centre tap (d == 0)
    k = 0
    for a in (-1, 0, 1):
        for b in (-1, 0, 1):
            d = a * W + b
            if d != 0:
                shifted = pltpu.roll(m, shift=(-d) % S, axis=1)   # shifted[f]=m[f+d]
                acc = acc + wmask[k:k + 1, :] * shifted
            k += 1

    sp = jax.nn.sigmoid(ws1_ref[0] * jnp.maximum(acc, 0.0))  # (Nb, S)

    # global_x = spatial_wise(mean) + global_x
    g2 = g + sp[:, None, :]                                  # (Nb, C, S)

    # ---- attention_wise: 1x1 conv C->F (MXU) + sigmoid ----------------------
    wa = wa_ref[...].astype(jnp.float32)                     # (F, C)
    for n in range(Nb):                                      # Nb static, unrolled
        logits = jnp.dot(wa, g2[n], preferred_element_type=jnp.float32)  # (F, S)
        out_ref[n] = jax.nn.sigmoid(logits).astype(out_ref.dtype)


def scale_channel_spatial_attention(x, params):
    """x: (N, C, H, W). params hold torch-layout weights (see __main__)."""
    N, C, H, W = x.shape
    S = H * W

    w1 = jnp.asarray(params['channel_wise_w1'], jnp.float32)   # (Cmid, C)
    w2 = jnp.asarray(params['channel_wise_w2'], jnp.float32)   # (C, Cmid)
    w3 = jnp.asarray(params['spatial_conv3x3'], jnp.float32).reshape(9)
    ws1 = jnp.asarray(params['spatial_conv1x1'], jnp.float32).reshape(1)
    wa = jnp.asarray(params['attention_w'], jnp.float32)       # (F, C)

    Cmid = w1.shape[0]
    F = wa.shape[0]

    x_flat = x.reshape(N, C, S)          # lane-dense spatial axis
    w1t = w1.T                           # (C, Cmid)

    # Precompute the 9 (3x3 weight * border-validity) rows once in the
    # wrapper; kills every per-tap integer compare / select in the kernel.
    iota = jnp.arange(S, dtype=jnp.int32)
    row = iota // W
    col = iota % W
    masks = []
    for a in (-1, 0, 1):
        for b in (-1, 0, 1):
            ok = ((row + a >= 0) & (row + a < H) &
                  (col + b >= 0) & (col + b < W))
            masks.append(ok)
    wmask = w3[:, None] * jnp.stack(masks, axis=0).astype(jnp.float32)  # (9, S)

    # Pack up to 8 samples per grid step so the (Nb, S) spatial-branch work
    # fills the sublane dimension and per-step overhead is amortised.
    Nb = min(N, 8)
    while N % Nb:
        Nb -= 1

    kernel = functools.partial(_scsa_kernel, W=W)

    out_flat = pl.pallas_call(
        kernel,
        out_shape=jax.ShapeDtypeStruct((N, F, S), x.dtype),
        grid=(N // Nb,),
        in_specs=[
            pl.BlockSpec((Nb, C, S), lambda n: (n, 0, 0)),      # x (per block)
            pl.BlockSpec((C, Cmid), lambda n: (0, 0)),          # w1^T
            pl.BlockSpec((C, Cmid), lambda n: (0, 0)),          # w2
            pl.BlockSpec((F, C), lambda n: (0, 0)),             # wa
            pl.BlockSpec((9, S), lambda n: (0, 0)),             # weight*mask rows
            pl.BlockSpec(memory_space=pltpu.MemorySpace.SMEM),  # spatial 1x1 scalar
        ],
        out_specs=pl.BlockSpec((Nb, F, S), lambda n: (n, 0, 0)),
        compiler_params=pltpu.CompilerParams(
            dimension_semantics=("parallel",)),                 # megacore sharding
    )(x_flat, w1t, w2, wa, wmask, ws1)

    return out_flat.reshape(N, F, H, W)


def _reference(x, params):
    """Pure-numpy (float64) replica of the PyTorch forward."""
    x = np.asarray(x, np.float64)
    w1 = np.asarray(params['channel_wise_w1'], np.float64)     # (Cmid, C)
    w2 = np.asarray(params['channel_wise_w2'], np.float64)     # (C, Cmid)
    w3 = np.asarray(params['spatial_conv3x3'], np.float64).reshape(3, 3)
    ws1 = float(np.asarray(params['spatial_conv1x1']).reshape(-1)[0])
    wa = np.asarray(params['attention_w'], np.float64)         # (F, C)

    def sig(v):
        return 1.0 / (1.0 + np.exp(-v))

    N, C, H, W = x.shape
    pooled = x.mean(axis=(2, 3))                               # (N, C)
    h = np.maximum(pooled @ w1.T, 0.0)                         # (N, Cmid)
    ch = sig(h @ w2.T)                                         # (N, C)
    g = x + ch[:, :, None, None]
    m = g.mean(axis=1)                                         # (N, H, W)
    mp = np.pad(m, ((0, 0), (1, 1), (1, 1)))
    conv = np.zeros_like(m)
    for di in range(3):
        for dj in range(3):
            conv += w3[di, dj] * mp[:, di:di + H, dj:dj + W]
    sp = sig(ws1 * np.maximum(conv, 0.0))[:, None, :, :]       # (N,1,H,W)
    g2 = sp + g
    out = sig(np.einsum('fc,nchw->nfhw', wa, g2))
    return out


if __name__ == "__main__":
    key = jax.random.PRNGKey(0)
    N, C, H, W = 2, 4, 16, 16          # in_planes = 4
    Cmid, F = 4, 4                     # out_planes = 4, num_features = 4
    ks = jax.random.split(key, 6)

    x = jax.random.normal(ks[0], (N, C, H, W), jnp.float32)
    params = {
        'channel_wise_w1': jax.random.normal(ks[1], (Cmid, C), jnp.float32)
                           * (2.0 / C) ** 0.5,
        'channel_wise_w2': jax.random.normal(ks[2], (C, Cmid), jnp.float32)
                           * (2.0 / Cmid) ** 0.5,
        'spatial_conv3x3': jax.random.normal(ks[3], (3, 3), jnp.float32)
                           * (2.0 / 9.0) ** 0.5,
        'spatial_conv1x1': jax.random.normal(ks[4], (1, 1), jnp.float32),
        'attention_w': jax.random.normal(ks[5], (F, C), jnp.float32)
                       * (2.0 / C) ** 0.5,
    }

    out = scale_channel_spatial_attention(x, params)
    out = jax.block_until_ready(out)

    ref = _reference(x, params)
    np.testing.assert_allclose(np.asarray(out), ref, rtol=1e-4, atol=1e-4)

    print("KERNEL_OK")
</pallas_src>

<mosaic_0001>
module attributes {stable_mosaic.version = 11 : i64} {
  func.func @_scsa_kernel(%arg0: i32, %arg1: memref<2x4x256xf32, #tpu.memory_space<vmem>>, %arg2: memref<4x4xf32, #tpu.memory_space<vmem>>, %arg3: memref<4x4xf32, #tpu.memory_space<vmem>>, %arg4: memref<4x4xf32, #tpu.memory_space<vmem>>, %arg5: memref<9x256xf32, #tpu.memory_space<vmem>>, %arg6: memref<1xf32, #tpu.memory_space<smem>>, %arg7: memref<2x4x256xf32, #tpu.memory_space<vmem>>) attributes {dimension_semantics = [#tpu.dimension_semantics<parallel>], iteration_bounds = array<i64: 1>, scalar_prefetch = 0 : i64, scratch_operands = 0 : i64, tpu.core_type = #tpu.core_type<tc>, window_params = [{transform_indices = @transform_0, window_bounds = array<i64: 2, 4, 256>}, {pipeline_mode = #tpu.pipeline_mode<synchronous>, transform_indices = @transform_1, window_bounds = array<i64: 4, 4>}, {pipeline_mode = #tpu.pipeline_mode<synchronous>, transform_indices = @transform_2, window_bounds = array<i64: 4, 4>}, {pipeline_mode = #tpu.pipeline_mode<synchronous>, transform_indices = @transform_3, window_bounds = array<i64: 4, 4>}, {pipeline_mode = #tpu.pipeline_mode<synchronous>, transform_indices = @transform_4, window_bounds = array<i64: 9, 256>}, {transform_indices = @transform_5, window_bounds = array<i64: 1>}, {transform_indices = @transform_6, window_bounds = array<i64: 2, 4, 256>}]} {
    %c0 = arith.constant 0 : index
    %c0_0 = arith.constant 0 : index
    %c0_1 = arith.constant 0 : index
    %0 = vector.load %arg1[%c0, %c0_0, %c0_1] : memref<2x4x256xf32, #tpu.memory_space<vmem>>, vector<2x4x256xf32>
    %cst = arith.constant dense<0.000000e+00> : vector<2x4xf32>
    %1 = vector.multi_reduction <add>, %0, %cst [2] : vector<2x4x256xf32> to vector<2x4xf32>
    %2 = vector.shape_cast %1 : vector<2x4xf32> to vector<2x4x1xf32>
    %cst_2 = arith.constant 2.560000e+02 : f32
    %3 = vector.broadcast %cst_2 : f32 to vector<2x4x1xf32>
    %4 = arith.divf %2, %3 : vector<2x4x1xf32>
    %c0_3 = arith.constant 0 : index
    %c0_4 = arith.constant 0 : index
    %5 = vector.load %arg2[%c0_3, %c0_4] : memref<4x4xf32, #tpu.memory_space<vmem>>, vector<4x4xf32>
    %c0_5 = arith.constant 0 : index
    %c0_6 = arith.constant 0 : index
    %6 = vector.load %arg3[%c0_5, %c0_6] : memref<4x4xf32, #tpu.memory_space<vmem>>, vector<4x4xf32>
    %7 = vector.shape_cast %5 : vector<4x4xf32> to vector<1x4x4xf32>
    %8 = vector.broadcast %4 : vector<2x4x1xf32> to vector<2x4x4xf32>
    %9 = vector.broadcast %7 : vector<1x4x4xf32> to vector<2x4x4xf32>
    %10 = arith.mulf %8, %9 : vector<2x4x4xf32>
    %cst_7 = arith.constant dense<0.000000e+00> : vector<2x4xf32>
    %11 = vector.multi_reduction <add>, %10, %cst_7 [1] : vector<2x4x4xf32> to vector<2x4xf32>
    %12 = vector.shape_cast %11 : vector<2x4xf32> to vector<2x1x4xf32>
    %cst_8 = arith.constant 0.000000e+00 : f32
    %13 = vector.broadcast %cst_8 : f32 to vector<2x1x4xf32>
    %14 = arith.maximumf %12, %13 : vector<2x1x4xf32>
    %15 = vector.shape_cast %6 : vector<4x4xf32> to vector<1x4x4xf32>
    %16 = vector.broadcast %14 : vector<2x1x4xf32> to vector<2x4x4xf32>
    %17 = vector.broadcast %15 : vector<1x4x4xf32> to vector<2x4x4xf32>
    %18 = arith.mulf %16, %17 : vector<2x4x4xf32>
    %cst_9 = arith.constant dense<0.000000e+00> : vector<2x4xf32>
    %19 = vector.multi_reduction <add>, %18, %cst_9 [2] : vector<2x4x4xf32> to vector<2x4xf32>
    %20 = vector.shape_cast %19 : vector<2x4xf32> to vector<2x4x1xf32>
    %21 = arith.negf %20 : vector<2x4x1xf32>
    %22 = math.exp %21 : vector<2x4x1xf32>
    %cst_10 = arith.constant 1.000000e+00 : f32
    %23 = vector.broadcast %cst_10 : f32 to vector<2x4x1xf32>
    %24 = arith.addf %23, %22 : vector<2x4x1xf32>
    %25 = arith.divf %23, %24 : vector<2x4x1xf32>
    %26 = vector.broadcast %25 : vector<2x4x1xf32> to vector<2x4x256xf32>
    %27 = arith.addf %0, %26 : vector<2x4x256xf32>
    %cst_11 = arith.constant dense<0.000000e+00> : vector<2x256xf32>
    %28 = vector.multi_reduction <add>, %27, %cst_11 [1] : vector<2x4x256xf32> to vector<2x256xf32>
    %cst_12 = arith.constant 4.000000e+00 : f32
    %29 = vector.broadcast %cst_12 : f32 to vector<2x256xf32>
    %30 = arith.divf %28, %29 : vector<2x256xf32>
    %c0_13 = arith.constant 0 : index
    %c0_14 = arith.constant 0 : index
    %31 = vector.load %arg5[%c0_13, %c0_14] : memref<9x256xf32, #tpu.memory_space<vmem>>, vector<9x256xf32>
    %32 = vector.extract_strided_slice %31 {offsets = [4, 0], sizes = [1, 256], strides = [1, 1]} : vector<9x256xf32> to vector<1x256xf32>
    %33 = vector.broadcast %32 : vector<1x256xf32> to vector<2x256xf32>
    %34 = arith.mulf %33, %30 : vector<2x256xf32>
    %c17_i32 = arith.constant 17 : i32
    %35 = tpu.dynamic_rotate %30 by %c17_i32 dim 1 : vector<2x256xf32>, i32 -> vector<2x256xf32>
    %36 = vector.extract_strided_slice %31 {offsets = [0, 0], sizes = [1, 256], strides = [1, 1]} : vector<9x256xf32> to vector<1x256xf32>
    %37 = vector.broadcast %36 : vector<1x256xf32> to vector<2x256xf32>
    %38 = arith.mulf %37, %35 : vector<2x256xf32>
    %39 = arith.addf %34, %38 : vector<2x256xf32>
    %c16_i32 = arith.constant 16 : i32
    %40 = tpu.dynamic_rotate %30 by %c16_i32 dim 1 : vector<2x256xf32>, i32 -> vector<2x256xf32>
    %41 = vector.extract_strided_slice %31 {offsets = [1, 0], sizes = [1, 256], strides = [1, 1]} : vector<9x256xf32> to vector<1x256xf32>
    %42 = vector.broadcast %41 : vector<1x256xf32> to vector<2x256xf32>
    %43 = arith.mulf %42, %40 : vector<2x256xf32>
    %44 = arith.addf %39, %43 : vector<2x256xf32>
    %c15_i32 = arith.constant 15 : i32
    %45 = tpu.dynamic_rotate %30 by %c15_i32 dim 1 : vector<2x256xf32>, i32 -> vector<2x256xf32>
    %46 = vector.extract_strided_slice %31 {offsets = [2, 0], sizes = [1, 256], strides = [1, 1]} : vector<9x256xf32> to vector<1x256xf32>
    %47 = vector.broadcast %46 : vector<1x256xf32> to vector<2x256xf32>
    %48 = arith.mulf %47, %45 : vector<2x256xf32>
    %49 = arith.addf %44, %48 : vector<2x256xf32>
    %c1_i32 = arith.constant 1 : i32
    %50 = tpu.dynamic_rotate %30 by %c1_i32 dim 1 : vector<2x256xf32>, i32 -> vector<2x256xf32>
    %51 = vector.extract_strided_slice %31 {offsets = [3, 0], sizes = [1, 256], strides = [1, 1]} : vector<9x256xf32> to vector<1x256xf32>
    %52 = vector.broadcast %51 : vector<1x256xf32> to vector<2x256xf32>
    %53 = arith.mulf %52, %50 : vector<2x256xf32>
    %54 = arith.addf %49, %53 : vector<2x256xf32>
    %c255_i32 = arith.constant 255 : i32
    %55 = tpu.dynamic_rotate %30 by %c255_i32 dim 1 : vector<2x256xf32>, i32 -> vector<2x256xf32>
    %56 = vector.extract_strided_slice %31 {offsets = [5, 0], sizes = [1, 256], strides = [1, 1]} : vector<9x256xf32> to vector<1x256xf32>
    %57 = vector.broadcast %56 : vector<1x256xf32> to vector<2x256xf32>
    %58 = arith.mulf %57, %55 : vector<2x256xf32>
    %59 = arith.addf %54, %58 : vector<2x256xf32>
    %c241_i32 = arith.constant 241 : i32
    %60 = tpu.dynamic_rotate %30 by %c241_i32 dim 1 : vector<2x256xf32>, i32 -> vector<2x256xf32>
    %61 = vector.extract_strided_slice %31 {offsets = [6, 0], sizes = [1, 256], strides = [1, 1]} : vector<9x256xf32> to vector<1x256xf32>
    %62 = vector.broadcast %61 : vector<1x256xf32> to vector<2x256xf32>
    %63 = arith.mulf %62, %60 : vector<2x256xf32>
    %64 = arith.addf %59, %63 : vector<2x256xf32>
    %c240_i32 = arith.constant 240 : i32
    %65 = tpu.dynamic_rotate %30 by %c240_i32 dim 1 : vector<2x256xf32>, i32 -> vector<2x256xf32>
    %66 = vector.extract_strided_slice %31 {offsets = [7, 0], sizes = [1, 256], strides = [1, 1]} : vector<9x256xf32> to vector<1x256xf32>
    %67 = vector.broadcast %66 : vector<1x256xf32> to vector<2x256xf32>
    %68 = arith.mulf %67, %65 : vector<2x256xf32>
    %69 = arith.addf %64, %68 : vector<2x256xf32>
    %c239_i32 = arith.constant 239 : i32
    %70 = tpu.dynamic_rotate %30 by %c239_i32 dim 1 : vector<2x256xf32>, i32 -> vector<2x256xf32>
    %71 = vector.extract_strided_slice %31 {offsets = [8, 0], sizes = [1, 256], strides = [1, 1]} : vector<9x256xf32> to vector<1x256xf32>
    %72 = vector.broadcast %71 : vector<1x256xf32> to vector<2x256xf32>
    %73 = arith.mulf %72, %70 : vector<2x256xf32>
    %74 = arith.addf %69, %73 : vector<2x256xf32>
    %c0_15 = arith.constant 0 : index
    %75 = memref.load %arg6[%c0_15] : memref<1xf32, #tpu.memory_space<smem>>
    %cst_16 = arith.constant 0.000000e+00 : f32
    %76 = vector.broadcast %cst_16 : f32 to vector<2x256xf32>
    %77 = arith.maximumf %74, %76 : vector<2x256xf32>
    %78 = vector.broadcast %75 : f32 to vector<2x256xf32>
    %79 = arith.mulf %78, %77 : vector<2x256xf32>
    %80 = arith.negf %79 : vector<2x256xf32>
    %81 = math.exp %80 : vector<2x256xf32>
    %cst_17 = arith.constant 1.000000e+00 : f32
    %82 = vector.broadcast %cst_17 : f32 to vector<2x256xf32>
    %83 = arith.addf %82, %81 : vector<2x256xf32>
    %84 = arith.divf %82, %83 : vector<2x256xf32>
    %85 = vector.shape_cast %84 : vector<2x256xf32> to vector<2x1x256xf32>
    %86 = vector.broadcast %85 : vector<2x1x256xf32> to vector<2x4x256xf32>
    %87 = arith.addf %27, %86 : vector<2x4x256xf32>
    %c0_18 = arith.constant 0 : index
    %c0_19 = arith.constant 0 : index
    %88 = vector.load %arg4[%c0_18, %c0_19] : memref<4x4xf32, #tpu.memory_space<vmem>>, vector<4x4xf32>
    %89 = vector.extract_strided_slice %87 {offsets = [0, 0, 0], sizes = [1, 4, 256], strides = [1, 1, 1]} : vector<2x4x256xf32> to vector<1x4x256xf32>
    %90 = vector.shape_cast %89 : vector<1x4x256xf32> to vector<4x256xf32>
    %cst_20 = arith.constant dense<0.000000e+00> : vector<4x256xf32>
    %91 = tpu.matmul %88, %90, %cst_20 {dimension_numbers = #tpu.dot_dimension_numbers<[1], [0], [0], [1], [0, 0, 1, 1], [], []>} : vector<4x4xf32>, vector<4x256xf32>, vector<4x256xf32> -> vector<4x256xf32>
    %92 = arith.negf %91 : vector<4x256xf32>
    %93 = math.exp %92 : vector<4x256xf32>
    %cst_21 = arith.constant 1.000000e+00 : f32
    %94 = vector.broadcast %cst_21 : f32 to vector<4x256xf32>
    %95 = arith.addf %94, %93 : vector<4x256xf32>
    %96 = arith.divf %94, %95 : vector<4x256xf32>
    %c0_22 = arith.constant 0 : index
    %c0_23 = arith.constant 0 : index
    %c0_24 = arith.constant 0 : index
    %97 = vector.load %arg7[%c0_22, %c0_23, %c0_24] : memref<2x4x256xf32, #tpu.memory_space<vmem>>, vector<1x4x256xf32>
    %98 = vector.shape_cast %97 : vector<1x4x256xf32> to vector<4x256xf32>
    %99 = vector.shape_cast %96 : vector<4x256xf32> to vector<1x4x256xf32>
    tpu.vector_store %arg7[%c0_22, %c0_23, %c0_24], %99 {strides = array<i32>} : memref<2x4x256xf32, #tpu.memory_space<vmem>>, vector<1x4x256xf32>,
    %100 = vector.extract_strided_slice %87 {offsets = [1, 0, 0], sizes = [1, 4, 256], strides = [1, 1, 1]} : vector<2x4x256xf32> to vector<1x4x256xf32>
    %101 = vector.shape_cast %100 : vector<1x4x256xf32> to vector<4x256xf32>
    %cst_25 = arith.constant dense<0.000000e+00> : vector<4x256xf32>
    %102 = tpu.matmul %88, %101, %cst_25 {dimension_numbers = #tpu.dot_dimension_numbers<[1], [0], [0], [1], [0, 0, 1, 1], [], []>} : vector<4x4xf32>, vector<4x256xf32>, vector<4x256xf32> -> vector<4x256xf32>
    %103 = arith.negf %102 : vector<4x256xf32>
    %104 = math.exp %103 : vector<4x256xf32>
    %cst_26 = arith.constant 1.000000e+00 : f32
    %105 = vector.broadcast %cst_26 : f32 to vector<4x256xf32>
    %106 = arith.addf %105, %104 : vector<4x256xf32>
    %107 = arith.divf %105, %106 : vector<4x256xf32>
    %c1 = arith.constant 1 : index
    %c0_27 = arith.constant 0 : index
    %c0_28 = arith.constant 0 : index
    %108 = vector.load %arg7[%c1, %c0_27, %c0_28] : memref<2x4x256xf32, #tpu.memory_space<vmem>>, vector<1x4x256xf32>
    %109 = vector.shape_cast %108 : vector<1x4x256xf32> to vector<4x256xf32>
    %110 = vector.shape_cast %107 : vector<4x256xf32> to vector<1x4x256xf32>
    tpu.vector_store %arg7[%c1, %c0_27, %c0_28], %110 {strides = array<i32>} : memref<2x4x256xf32, #tpu.memory_space<vmem>>, vector<1x4x256xf32>,
    return
  }
  func.func @transform_0(%arg0: i32) -> (i32, i32, i32) {
    %c0_i32 = arith.constant 0 : i32
    %c0_i32_0 = arith.constant 0 : i32
    %c0_i32_1 = arith.constant 0 : i32
    return %arg0, %c0_i32, %c0_i32_0 : i32, i32, i32
  }
  func.func @transform_1(%arg0: i32) -> (i32, i32) {
    %c0_i32 = arith.constant 0 : i32
    %c0_i32_0 = arith.constant 0 : i32
    %c0_i32_1 = arith.constant 0 : i32
    return %c0_i32, %c0_i32_0 : i32, i32
  }
  func.func @transform_2(%arg0: i32) -> (i32, i32) {
    %c0_i32 = arith.constant 0 : i32
    %c0_i32_0 = arith.constant 0 : i32
    %c0_i32_1 = arith.constant 0 : i32
    return %c0_i32, %c0_i32_0 : i32, i32
  }
  func.func @transform_3(%arg0: i32) -> (i32, i32) {
    %c0_i32 = arith.constant 0 : i32
    %c0_i32_0 = arith.constant 0 : i32
    %c0_i32_1 = arith.constant 0 : i32
    return %c0_i32, %c0_i32_0 : i32, i32
  }
  func.func @transform_4(%arg0: i32) -> (i32, i32) {
    %c0_i32 = arith.constant 0 : i32
    %c0_i32_0 = arith.constant 0 : i32
    %c0_i32_1 = arith.constant 0 : i32
    return %c0_i32, %c0_i32_0 : i32, i32
  }
  func.func @transform_5(%arg0: i32) -> i32 {
    %c0_i32 = arith.constant 0 : i32
    %c0_i32_0 = arith.constant 0 : i32
    return %c0_i32 : i32
  }
  func.func @transform_6(%arg0: i32) -> (i32, i32, i32) {
    %c0_i32 = arith.constant 0 : i32
    %c0_i32_0 = arith.constant 0 : i32
    %c0_i32_1 = arith.constant 0 : i32
    return %arg0, %c0_i32, %c0_i32_0 : i32, i32, i32
  }
}

</mosaic_0001>

<llo_original>
// kernel: tpu_custom_call.1
$region0: #{tpu_custom_call.1}
  #allocation0 [shape = 'u32[]', space=smem, size = 0x4, offset = 0x4, fixed_abs, tag = 'smem constant byte address 0x4 - core index']
  #allocation1 [shape = 'u32[144,128]{1,0:T(1,128)}', space=vmem, size = 0x12000, scoped, tag = 'internal scratch']
  #allocation2 [shape = 'f32[1]{0:T(128)S(6)}', space=smem, size = 0x200, scoped, tag = 'scoped memory for tpu_custom_call.1']
  %s0 = inlined_call_operand.hbm [shape: f32[2,4,256], index: 0, kind: input, shape index: {}]
  %s1 = inlined_call_operand.vmem [shape: f32[4,4], index: 1, kind: input, shape index: {}]
  %s2 = inlined_call_operand.vmem [shape: f32[4,4], index: 2, kind: input, shape index: {}]
  %s3 = inlined_call_operand.vmem [shape: f32[4,4], index: 3, kind: input, shape index: {}]
  %s4 = inlined_call_operand.hbm [shape: f32[9,256], index: 4, kind: input, shape index: {}]
  %s5 = inlined_call_operand.<no memory space> [shape: f32[1], index: 5, kind: input, shape index: {}]
  %s6 = inlined_call_operand.hbm [shape: f32[2,4,256], index: 6, kind: output, shape index: {}]
  %s7 = sld [smem:[#allocation0]]
  $region42: #{tpu_custom_call.1} parent=0
    _
  %s9 = ssub.s32 1, %s7
  %s10 = scalar_select 0, %s9, %s7
  %11 = sst [smem:[#allocation2]] %s5
  $region1: #{tpu_custom_call.1} parent=0
    #allocation3 [shape = 'u8[8192]{0}', space=vmem, size = 0x2000, scoped, tag = 'input window, operand 0, single buffered']
    #allocation4 [shape = 's32[1]{0}', space=sflag, size = 0x4, scoped, tag = 'scoped memory for tpu_custom_call.1']
    #allocation5 [shape = 's32[1]{0}', space=sflag, size = 0x4, scoped, tag = 'scoped memory for tpu_custom_call.1']
    #allocation6 [shape = 'u8[16384]{0}', space=vmem, size = 0x4000, scoped, tag = 'input window, operand 4, single buffered']
    #allocation7 [shape = 's32[1]{0}', space=sflag, size = 0x4, scoped, tag = 'scoped memory for tpu_custom_call.1']
    #allocation8 [shape = 'u8[8192]{0}', space=vmem, size = 0x2000, scoped, tag = 'output window, operand 0, single buffered']
    %12 = vsyncpa [#allocation4], 0
    %13 = vsyncpa [#allocation7], 0
    %14 = vsyncpa [#allocation5], 0
    // Predicated region
    $region2: #{tpu_custom_call.1} parent=1 // pred_check
      _
    $region3: #{tpu_custom_call.1} parent=1 // pred_check_branch
      %16 = sbr.rel (0) target = $region5
    $region4: #{tpu_custom_call.1} parent=1 // pred_region
      %s18 = ssub.s32 256, 256
      %19 = vsyncadd [#allocation4], %s18
      %s20 = sshll.u32 [#allocation3], 4
      %s21 = int_to_ptr.vmem [resolvable:$true] %s20
      %26 = dma.hbm_to_vmem [thread:$0]  %s0, 256, %s21, [#allocation4], 128, 128, 8
    $region5: #{tpu_custom_call.1} parent=1 // pred_fallthru
      _
    // Predicated region
    $region6: #{tpu_custom_call.1} parent=1 // pred_check
      _
    $region7: #{tpu_custom_call.1} parent=1 // pred_check_branch
      %28 = sbr.rel (0) target = $region9
    $region8: #{tpu_custom_call.1} parent=1 // pred_region
      _
    $region9: #{tpu_custom_call.1} parent=1 // pred_fallthru
      _
    // Predicated region
    $region10: #{tpu_custom_call.1} parent=1 // pred_check
      _
    $region11: #{tpu_custom_call.1} parent=1 // pred_check_branch
      %30 = sbr.rel (0) target = $region13
    $region12: #{tpu_custom_call.1} parent=1 // pred_region
      _
    $region13: #{tpu_custom_call.1} parent=1 // pred_fallthru
      _
    // Predicated region
    $region14: #{tpu_custom_call.1} parent=1 // pred_check
      _
    $region15: #{tpu_custom_call.1} parent=1 // pred_check_branch
      %32 = sbr.rel (0) target = $region17
    $region16: #{tpu_custom_call.1} parent=1 // pred_region
      _
    $region17: #{tpu_custom_call.1} parent=1 // pred_fallthru
      _
    // Predicated region
    $region18: #{tpu_custom_call.1} parent=1 // pred_check
      _
    $region19: #{tpu_custom_call.1} parent=1 // pred_check_branch
      %34 = sbr.rel (0) target = $region21
    $region20: #{tpu_custom_call.1} parent=1 // pred_region
      %s36 = ssub.s32 512, 512
      %37 = vsyncadd [#allocation7], %s36
      %s38 = sshll.u32 [#allocation6], 4
      %s39 = int_to_ptr.vmem [resolvable:$true] %s38
      %44 = dma.hbm_to_vmem [thread:$0]  %s4, 512, %s39, [#allocation7], 256, 256, 16
    $region21: #{tpu_custom_call.1} parent=1 // pred_fallthru
      _
    // Predicated region
    $region22: #{tpu_custom_call.1} parent=1 // pred_check
      _
    $region23: #{tpu_custom_call.1} parent=1 // pred_check_branch
      %46 = sbr.rel (0) target = $region25
    $region24: #{tpu_custom_call.1} parent=1 // pred_region
      _
    $region25: #{tpu_custom_call.1} parent=1 // pred_fallthru
      _
    // Predicated region
    $region26: #{tpu_custom_call.1} parent=1 // pred_check
      _
    $region27: #{tpu_custom_call.1} parent=1 // pred_check_branch
      %48 = sbr.rel (0) target = $region29
    $region28: #{tpu_custom_call.1} parent=1 // pred_region
      %49 = dma.done [#allocation4], 256
    $region29: #{tpu_custom_call.1} parent=1 // pred_fallthru
      _
    // Predicated region
    $region30: #{tpu_custom_call.1} parent=1 // pred_check
      _
    $region31: #{tpu_custom_call.1} parent=1 // pred_check_branch
      %51 = sbr.rel (0) target = $region33
    $region32: #{tpu_custom_call.1} parent=1 // pred_region
      %52 = dma.done [#allocation7], 512
    $region33: #{tpu_custom_call.1} parent=1 // pred_fallthru
      _
    %v53 = vld [vmem:[#allocation3] sm:$0xff]
    %v54 = vld [vmem:[#allocation3 + $0x8] sm:$0xff]
    %v57 = vcombine.high %v53, %v53
    %v58 = vcombine.high %v54, %v54
    %vm61 = vcmask 1043456
    %v62 = vsel %vm61, %v53, 0.0
    %v63 = vsel %vm61, %v57, 0.0
    %v64 = vadd.f32 %v62, %v63
    %65 = vadd.xlane.f32.xlu0 %v64
    %v66 = vpop.xlane.xlu0 %65
    %v67 = vsel %vm61, %v54, 0.0
    %v68 = vsel %vm61, %v58, 0.0
    %v69 = vadd.f32 %v67, %v68
    %70 = vadd.xlane.f32.xlu0 %v69
    %v71 = vpop.xlane.xlu0 %70
    %v72 = vrcp.pop 256.0
    %v73 = vmul.f32 %v66, %v72
    %v74 = vmul.f32 %v71, %v72
    %v75 = vld [vmem:[%s1] sm:$0xf]
    %v76 = vld [vmem:[%s2] sm:$0xf]
    %v77 = vmul.f32 %v73, %v75
    %v78 = vmul.f32 %v74, %v75
    %vm79 = vcmask 27648
    %v80 = vsel %vm79, %v77, 0.0
    %v81 = vrot.slane %v80, 4
    %v82 = vadd.f32 %v80, %v81
    %v83 = vrot.slane %v82, 2
    %v84 = vadd.f32 %v82, %v83
    %v85 = vrot.slane %v84, 1
    %v86 = vadd.f32 %v84, %v85
    %v87 = vsel %vm79, %v78, 0.0
    %v88 = vrot.slane %v87, 4
    %v89 = vadd.f32 %v87, %v88
    %v90 = vrot.slane %v89, 2
    %v91 = vadd.f32 %v89, %v90
    %v92 = vrot.slane %v91, 1
    %v93 = vadd.f32 %v91, %v92
    %v94 = vmax.f32 %v86, 0.0
    %v95 = vmax.f32 %v93, 0.0
    %v96 = vmul.f32 %v94, %v76
    %v97 = vmul.f32 %v95, %v76
    %v98 = vsel %vm79, %v96, 0.0
    %99 = vadd.xlane.f32.xlu0 %v98
    %v100 = vpop.xlane.xlu0 %99
    %v101 = vsel %vm79, %v97, 0.0
    %102 = vadd.xlane.f32.xlu0 %v101
    %v103 = vpop.xlane.xlu0 %102
    %v104 = vxor.u32 %v100, 2147483648
    %v105 = vxor.u32 %v103, 2147483648
    %v106 = vmul.f32 %v104, 1.442695
    %v107 = vpow.pop %v106
    %v108 = vmul.f32 %v105, 1.442695
    %v109 = vpow.pop %v108
    %v110 = vadd.f32 %v107, 1.0
    %v111 = vadd.f32 %v109, 1.0
    %v112 = vrcp.pop %v110
    %v113 = vmul.f32 1.0, %v112
    %v114 = vrcp.pop %v111
    %v115 = vmul.f32 1.0, %v114
    %v119 = vunpack.c.l.s4 839922192
    %v120 = vunpack.c.0.s8 %v119
    %v121 = vlaneseq
    %v122 = vshrl.u32 %v121, 7
    %v123 = vsub.s32 %v120, %v122
    %v124 = vrot.slane %v113, %v123
    %v126 = vunpack.c.l.s4 839922192
    %v127 = vunpack.c.0.s8 %v126
    %v128 = vlaneseq
    %v129 = vshrl.u32 %v128, 7
    %v130 = vsub.s32 %v127, %v129
    %v131 = vrot.slane %v115, %v130
    %v134 = vadd.f32 %v53, %v124
    %v135 = vadd.f32 %v54, %v131
    %v138 = vcombine.high %v134, %v134
    %v139 = vcombine.high %v135, %v135
    %v142 = vsel %vm61, %v134, 0.0
    %v143 = vrot.slane %v142, 4
    %v144 = vadd.f32 %v142, %v143
    %v145 = vrot.slane %v144, 2
    %v146 = vadd.f32 %v144, %v145
    %v147 = vrot.slane %v146, 1
    %v148 = vadd.f32 %v146, %v147
    %v149 = vsel %vm61, %v138, 0.0
    %v150 = vrot.slane %v149, 4
    %v151 = vadd.f32 %v149, %v150
    %v152 = vrot.slane %v151, 2
    %v153 = vadd.f32 %v151, %v152
    %v154 = vrot.slane %v153, 1
    %v155 = vadd.f32 %v153, %v154
    %v156 = vsel %vm61, %v135, 0.0
    %v157 = vrot.slane %v156, 4
    %v158 = vadd.f32 %v156, %v157
    %v159 = vrot.slane %v158, 2
    %v160 = vadd.f32 %v158, %v159
    %v161 = vrot.slane %v160, 1
    %v162 = vadd.f32 %v160, %v161
    %v163 = vsel %vm61, %v139, 0.0
    %v164 = vrot.slane %v163, 4
    %v165 = vadd.f32 %v163, %v164
    %v166 = vrot.slane %v165, 2
    %v167 = vadd.f32 %v165, %v166
    %v168 = vrot.slane %v167, 1
    %v169 = vadd.f32 %v167, %v168
    %v170 = vrcp.pop 4.0
    %v171 = vmul.f32 %v148, %v170
    %v172 = vmul.f32 %v155, %v170
    %v173 = vmul.f32 %v162, %v170
    %v174 = vmul.f32 %v169, %v170
    %v175 = vld [vmem:[#allocation6] sm:$0xff]
    %v176 = vld [vmem:[#allocation6 + $0x8] sm:$0xff]
    %v177 = vld [vmem:[#allocation6 + $0x10] sm:$0x1]
    %v178 = vld [vmem:[#allocation6 + $0x18] sm:$0x1]
    %v179 = vlaneseq
    %v180 = vshrl.u32 %v179, 7
    %v181 = vsub.s32 4, %v180
    %v182 = vrot.slane %v175, %v181
    %v183 = vlaneseq
    %v184 = vshrl.u32 %v183, 7
    %v185 = vsub.s32 4, %v184
    %v186 = vrot.slane %v176, %v185
    %vm191 = vcmask 1041409
    %v192 = vsel %vm191, %v173, %v171
    %v193 = vsel %vm191, %v174, %v172
    %v196 = vmul.f32 %v182, %v192
    %v197 = vmul.f32 %v186, %v193
    %198 = vrot.lane.b32.xlu0 %v192, 17
    %v199 = vpop.permute.xlu0 %198
    %200 = vrot.lane.b32.xlu0 %v193, 17
    %v201 = vpop.permute.xlu0 %200
    %v202 = vlaneseq
    %v203 = vand.u32 %v202, 127
    %vm204 = vcmp.lt.s32.totalorder %v203, 17
    %v205 = vsel %vm204, %v199, %v201
    %v206 = vsel %vm204, %v201, %v199
    %v207 = vlaneseq
    %v208 = vshrl.u32 %v207, 7
    %v209 = vsub.s32 0, %v208
    %v210 = vrot.slane %v175, %v209
    %v211 = vlaneseq
    %v212 = vshrl.u32 %v211, 7
    %v213 = vsub.s32 0, %v212
    %v214 = vrot.slane %v176, %v213
    %v215 = vmul.f32 %v210, %v206
    %v216 = vmul.f32 %v214, %v205
    %v217 = vadd.f32 %v196, %v215
    %v218 = vadd.f32 %v197, %v216
    %219 = vrot.lane.b32.xlu0 %v192, 16
    %v220 = vpop.permute.xlu0 %219
    %221 = vrot.lane.b32.xlu0 %v193, 16
    %v222 = vpop.permute.xlu0 %221
    %vm223 = vcmp.lt.s32.totalorder %v203, 16
    %v224 = vsel %vm223, %v220, %v222
    %v225 = vsel %vm223, %v222, %v220
    %v226 = vlaneseq
    %v227 = vshrl.u32 %v226, 7
    %v228 = vsub.s32 1, %v227
    %v229 = vrot.slane %v175, %v228
    %v230 = vlaneseq
    %v231 = vshrl.u32 %v230, 7
    %v232 = vsub.s32 1, %v231
    %v233 = vrot.slane %v176, %v232
    %v234 = vmul.f32 %v229, %v225
    %v235 = vmul.f32 %v233, %v224
    %v236 = vadd.f32 %v217, %v234
    %v237 = vadd.f32 %v218, %v235
    %238 = vrot.lane.b32.xlu0 %v192, 15
    %v239 = vpop.permute.xlu0 %238
    %240 = vrot.lane.b32.xlu0 %v193, 15
    %v241 = vpop.permute.xlu0 %240
    %vm242 = vcmp.lt.s32.totalorder %v203, 15
    %v243 = vsel %vm242, %v239, %v241
    %v244 = vsel %vm242, %v241, %v239
    %v245 = vlaneseq
    %v246 = vshrl.u32 %v245, 7
    %v247 = vsub.s32 2, %v246
    %v248 = vrot.slane %v175, %v247
    %v249 = vlaneseq
    %v250 = vshrl.u32 %v249, 7
    %v251 = vsub.s32 2, %v250
    %v252 = vrot.slane %v176, %v251
    %v253 = vmul.f32 %v248, %v244
    %v254 = vmul.f32 %v252, %v243
    %v255 = vadd.f32 %v236, %v253
    %v256 = vadd.f32 %v237, %v254
    %257 = vrot.lane.b32.xlu0 %v192, 1
    %v258 = vpop.permute.xlu0 %257
    %259 = vrot.lane.b32.xlu0 %v193, 1
    %v260 = vpop.permute.xlu0 %259
    %vm261 = vcmp.lt.s32.totalorder %v203, 1
    %v262 = vsel %vm261, %v258, %v260
    %v263 = vsel %vm261, %v260, %v258
    %v264 = vlaneseq
    %v265 = vshrl.u32 %v264, 7
    %v266 = vsub.s32 3, %v265
    %v267 = vrot.slane %v175, %v266
    %v268 = vlaneseq
    %v269 = vshrl.u32 %v268, 7
    %v270 = vsub.s32 3, %v269
    %v271 = vrot.slane %v176, %v270
    %v272 = vmul.f32 %v267, %v263
    %v273 = vmul.f32 %v271, %v262
    %v274 = vadd.f32 %v255, %v272
    %v275 = vadd.f32 %v256, %v273
    %276 = vrot.lane.b32.xlu0 %v192, 127
    %v277 = vpop.permute.xlu0 %276
    %278 = vrot.lane.b32.xlu0 %v193, 127
    %v279 = vpop.permute.xlu0 %278
    %vm280 = vcmp.lt.s32.totalorder %v203, 127
    %v281 = vsel %vm280, %v277, %v279
    %v282 = vsel %vm280, %v279, %v277
    %v283 = vlaneseq
    %v284 = vshrl.u32 %v283, 7
    %v285 = vsub.s32 5, %v284
    %v286 = vrot.slane %v175, %v285
    %v287 = vlaneseq
    %v288 = vshrl.u32 %v287, 7
    %v289 = vsub.s32 5, %v288
    %v290 = vrot.slane %v176, %v289
    %v291 = vmul.f32 %v286, %v281
    %v292 = vmul.f32 %v290, %v282
    %v293 = vadd.f32 %v274, %v291
    %v294 = vadd.f32 %v275, %v292
    %295 = vrot.lane.b32.xlu0 %v192, 113
    %v296 = vpop.permute.xlu0 %295
    %297 = vrot.lane.b32.xlu0 %v193, 113
    %v298 = vpop.permute.xlu0 %297
    %vm299 = vcmp.lt.s32.totalorder %v203, 113
    %v300 = vsel %vm299, %v296, %v298
    %v301 = vsel %vm299, %v298, %v296
    %v302 = vlaneseq
    %v303 = vshrl.u32 %v302, 7
    %v304 = vsub.s32 6, %v303
    %v305 = vrot.slane %v175, %v304
    %v306 = vlaneseq
    %v307 = vshrl.u32 %v306, 7
    %v308 = vsub.s32 6, %v307
    %v309 = vrot.slane %v176, %v308
    %v310 = vmul.f32 %v305, %v300
    %v311 = vmul.f32 %v309, %v301
    %v312 = vadd.f32 %v293, %v310
    %v313 = vadd.f32 %v294, %v311
    %314 = vrot.lane.b32.xlu0 %v192, 112
    %v315 = vpop.permute.xlu0 %314
    %316 = vrot.lane.b32.xlu0 %v193, 112
    %v317 = vpop.permute.xlu0 %316
    %vm318 = vcmp.lt.s32.totalorder %v203, 112
    %v319 = vsel %vm318, %v315, %v317
    %v320 = vsel %vm318, %v317, %v315
    %v321 = vlaneseq
    %v322 = vshrl.u32 %v321, 7
    %v323 = vsub.s32 7, %v322
    %v324 = vrot.slane %v175, %v323
    %v325 = vlaneseq
    %v326 = vshrl.u32 %v325, 7
    %v327 = vsub.s32 7, %v326
    %v328 = vrot.slane %v176, %v327
    %v329 = vmul.f32 %v324, %v319
    %v330 = vmul.f32 %v328, %v320
    %v331 = vadd.f32 %v312, %v329
    %v332 = vadd.f32 %v313, %v330
    %333 = vrot.lane.b32.xlu0 %v192, 111
    %v334 = vpop.permute.xlu0 %333
    %335 = vrot.lane.b32.xlu0 %v193, 111
    %v336 = vpop.permute.xlu0 %335
    %vm337 = vcmp.lt.s32.totalorder %v203, 111
    %v338 = vsel %vm337, %v334, %v336
    %v339 = vsel %vm337, %v336, %v334
    %v340 = vlaneseq
    %v341 = vshrl.u32 %v340, 7
    %v342 = vsub.s32 0, %v341
    %v343 = vrot.slane %v177, %v342
    %v344 = vlaneseq
    %v345 = vshrl.u32 %v344, 7
    %v346 = vsub.s32 0, %v345
    %v347 = vrot.slane %v178, %v346
    %v348 = vmul.f32 %v343, %v338
    %v349 = vmul.f32 %v347, %v339
    %v350 = vadd.f32 %v331, %v348
    %v351 = vadd.f32 %v332, %v349
    %s352 = sld [smem:[#allocation2]]
    %v353 = vmax.f32 %v350, 0.0
    %v354 = vmax.f32 %v351, 0.0
    %v355 = vstv %s352
    %v356 = vmul.f32 %v355, %v353
    %v357 = vmul.f32 %v355, %v354
    %v358 = vxor.u32 %v356, 2147483648
    %v359 = vxor.u32 %v357, 2147483648
    %v360 = vmul.f32 %v358, 1.442695
    %v361 = vpow.pop %v360
    %v362 = vmul.f32 %v359, 1.442695
    %v363 = vpow.pop %v362
    %v364 = vadd.f32 %v361, 1.0
    %v365 = vadd.f32 %v363, 1.0
    %v366 = vrcp.pop %v364
    %v367 = vmul.f32 1.0, %v366
    %v368 = vrcp.pop %v365
    %v369 = vmul.f32 1.0, %v368
    %v372 = vcombine.low %v367, %v369
    %v374 = vunpack.c.l.s4 1966171168
    %v375 = vunpack.c.0.s8 %v374
    %v376 = vlaneseq
    %v377 = vshrl.u32 %v376, 7
    %v378 = vsub.s32 %v375, %v377
    %v379 = vrot.slane %v372, %v378
    %v380 = vcombine.high %v379, %v379
    %v382 = vunpack.c.l.s4 1966171168
    %v383 = vunpack.c.0.s8 %v382
    %v384 = vlaneseq
    %v385 = vshrl.u32 %v384, 7
    %v386 = vsub.s32 %v383, %v385
    %v387 = vrot.slane %v379, %v386
    %v389 = vunpack.c.l.s4 1966171168
    %v390 = vunpack.c.0.s8 %v389
    %v391 = vlaneseq
    %v392 = vshrl.u32 %v391, 7
    %v393 = vsub.s32 %v390, %v392
    %v394 = vrot.slane %v380, %v393
    %v395 = vlaneseq
    %v396 = vshrl.u32 %v395, 7
    %v397 = vsub.s32 0, %v396
    %v398 = vrot.slane %v387, %v397
    %v399 = vlaneseq
    %v400 = vshrl.u32 %v399, 7
    %v401 = vsub.s32 1, %v400
    %v402 = vrot.slane %v387, %v401
    %v403 = vlaneseq
    %v404 = vshrl.u32 %v403, 7
    %v405 = vsub.s32 0, %v404
    %v406 = vrot.slane %v394, %v405
    %v407 = vlaneseq
    %v408 = vshrl.u32 %v407, 7
    %v409 = vsub.s32 1, %v408
    %v410 = vrot.slane %v394, %v409
    %v411 = vcombine.low %v398, %v402
    %v412 = vcombine.low %v406, %v410
    %v415 = vadd.f32 %v134, %v411
    %v416 = vadd.f32 %v135, %v412
    %v417 = vld [vmem:[%s3] sm:$0xf]
    %v419 = vcombine.high %v415, %v415
    %vm420 = vcmask 31744
    %v422 = vsel %vm420, %v417, 0
    %v424 = vsel %vm61, %v415, 0
    %v426 = vsel %vm61, %v419, 0
    %428 = vmatprep.subr.mxu0 %v426
    %429 = vmatpush1.msra.mxu0 %v424
    %430 = vmatprep.subr.mxu0 0.0
    %431 = vmatpush1.msra.mxu0 0.0
    %432 = vmatprep.subr.mxu0 0.0
    %433 = vmatpush1.msra.mxu0 0.0
    %434 = vmatprep.subr.mxu0 0.0
    %435 = vmatpush1.msra.mxu0 0.0
    %436 = vmatprep.subr.mxu0 0.0
    %437 = vmatpush1.msra.mxu0 0.0
    %438 = vmatprep.subr.mxu0 0.0
    %439 = vmatpush1.msra.mxu0 0.0
    %440 = vmatprep.subr.mxu0 0.0
    %441 = vmatpush1.msra.mxu0 0.0
    %442 = vmatprep.subr.mxu0 0.0
    %443 = vmatpush1.msra.mxu0 0.0
    %444 = vmatprep.subr.mxu0 0.0
    %445 = vmatpush1.msra.mxu0 0.0
    %446 = vmatprep.subr.mxu0 0.0
    %447 = vmatpush1.msra.mxu0 0.0
    %448 = vmatprep.subr.mxu0 0.0
    %449 = vmatpush1.msra.mxu0 0.0
    %450 = vmatprep.subr.mxu0 0.0
    %451 = vmatpush1.msra.mxu0 0.0
    %452 = vmatprep.subr.mxu0 0.0
    %453 = vmatpush1.msra.mxu0 0.0
    %454 = vmatprep.subr.mxu0 0.0
    %455 = vmatpush1.msra.mxu0 0.0
    %456 = vmatprep.subr.mxu0 0.0
    %457 = vmatpush1.msra.mxu0 0.0
    %458 = vmatprep.subr.mxu0 0.0
    %459 = vmatpush1.msra.mxu0 0.0
    %460 = vmatprep.subr.mxu0 0.0
    %461 = vmatpush1.msra.mxu0 0.0
    %462 = vmatprep.subr.mxu0 0.0
    %463 = vmatpush1.msra.mxu0 0.0
    %464 = vmatprep.subr.mxu0 0.0
    %465 = vmatpush1.msra.mxu0 0.0
    %466 = vmatprep.subr.mxu0 0.0
    %467 = vmatpush1.msra.mxu0 0.0
    %468 = vmatprep.subr.mxu0 0.0
    %469 = vmatpush1.msra.mxu0 0.0
    %470 = vmatprep.subr.mxu0 0.0
    %471 = vmatpush1.msra.mxu0 0.0
    %472 = vmatprep.subr.mxu0 0.0
    %473 = vmatpush1.msra.mxu0 0.0
    %474 = vmatprep.subr.mxu0 0.0
    %475 = vmatpush1.msra.mxu0 0.0
    %476 = vmatprep.subr.mxu0 0.0
    %477 = vmatpush1.msra.mxu0 0.0
    %478 = vmatprep.subr.mxu0 0.0
    %479 = vmatpush1.msra.mxu0 0.0
    %480 = vmatprep.subr.mxu0 0.0
    %481 = vmatpush1.msra.mxu0 0.0
    %482 = vmatprep.subr.mxu0 0.0
    %483 = vmatpush1.msra.mxu0 0.0
    %484 = vmatprep.subr.mxu0 0.0
    %485 = vmatpush1.msra.mxu0 0.0
    %486 = vmatprep.subr.mxu0 0.0
    %487 = vmatpush1.msra.mxu0 0.0
    %488 = vmatprep.subr.mxu0 0.0
    %489 = vmatpush1.msra.mxu0 0.0
    %490 = vmatprep.subr.mxu0 0.0
    %491 = vmatpush1.msra.mxu0 0.0
    %492 = vmatprep.mubr.f32.mxu0 0.0
    %493 = vmatmul.mubr.f32.gmra.mrb[0].mxu0 %v422
    %v494 = vpop.f32.mrb[0].mxu0
    %v495 = vadd.f32 0.0, %v494
    %v496 = vpop.f32.mrb[0].mxu0
    %v497 = vadd.f32 0.0, %v496
    %498 = vdwg.mxu0
    %v499 = vxor.u32 %v495, 2147483648
    %v500 = vxor.u32 %v497, 2147483648
    %v501 = vmul.f32 %v499, 1.442695
    %v502 = vpow.pop %v501
    %v503 = vmul.f32 %v500, 1.442695
    %v504 = vpow.pop %v503
    %v505 = vadd.f32 %v502, 1.0
    %v506 = vadd.f32 %v504, 1.0
    %v507 = vrcp.pop %v505
    %v508 = vmul.f32 1.0, %v507
    %v509 = vrcp.pop %v506
    %v510 = vmul.f32 1.0, %v509
    %v513 = vcombine.low %v508, %v510
    %515 = vst [vmem:[#allocation8] sm:$0xff] %v513
    %v517 = vcombine.high %v416, %v416
    %v518 = vsel %vm61, %v416, 0
    %v520 = vsel %vm61, %v517, 0
    %522 = vmatprep.subr.mxu0 %v520
    %523 = vmatpush1.msra.mxu0 %v518
    %524 = vmatprep.subr.mxu0 0.0
    %525 = vmatpush1.msra.mxu0 0.0
    %526 = vmatprep.subr.mxu0 0.0
    %527 = vmatpush1.msra.mxu0 0.0
    %528 = vmatprep.subr.mxu0 0.0
    %529 = vmatpush1.msra.mxu0 0.0
    %530 = vmatprep.subr.mxu0 0.0
    %531 = vmatpush1.msra.mxu0 0.0
    %532 = vmatprep.subr.mxu0 0.0
    %533 = vmatpush1.msra.mxu0 0.0
    %534 = vmatprep.subr.mxu0 0.0
    %535 = vmatpush1.msra.mxu0 0.0
    %536 = vmatprep.subr.mxu0 0.0
    %537 = vmatpush1.msra.mxu0 0.0
    %538 = vmatprep.subr.mxu0 0.0
    %539 = vmatpush1.msra.mxu0 0.0
    %540 = vmatprep.subr.mxu0 0.0
    %541 = vmatpush1.msra.mxu0 0.0
    %542 = vmatprep.subr.mxu0 0.0
    %543 = vmatpush1.msra.mxu0 0.0
    %544 = vmatprep.subr.mxu0 0.0
    %545 = vmatpush1.msra.mxu0 0.0
    %546 = vmatprep.subr.mxu0 0.0
    %547 = vmatpush1.msra.mxu0 0.0
    %548 = vmatprep.subr.mxu0 0.0
    %549 = vmatpush1.msra.mxu0 0.0
    %550 = vmatprep.subr.mxu0 0.0
    %551 = vmatpush1.msra.mxu0 0.0
    %552 = vmatprep.subr.mxu0 0.0
    %553 = vmatpush1.msra.mxu0 0.0
    %554 = vmatprep.subr.mxu0 0.0
    %555 = vmatpush1.msra.mxu0 0.0
    %556 = vmatprep.subr.mxu0 0.0
    %557 = vmatpush1.msra.mxu0 0.0
    %558 = vmatprep.subr.mxu0 0.0
    %559 = vmatpush1.msra.mxu0 0.0
    %560 = vmatprep.subr.mxu0 0.0
    %561 = vmatpush1.msra.mxu0 0.0
    %562 = vmatprep.subr.mxu0 0.0
    %563 = vmatpush1.msra.mxu0 0.0
    %564 = vmatprep.subr.mxu0 0.0
    %565 = vmatpush1.msra.mxu0 0.0
    %566 = vmatprep.subr.mxu0 0.0
    %567 = vmatpush1.msra.mxu0 0.0
    %568 = vmatprep.subr.mxu0 0.0
    %569 = vmatpush1.msra.mxu0 0.0
    %570 = vmatprep.subr.mxu0 0.0
    %571 = vmatpush1.msra.mxu0 0.0
    %572 = vmatprep.subr.mxu0 0.0
    %573 = vmatpush1.msra.mxu0 0.0
    %574 = vmatprep.subr.mxu0 0.0
    %575 = vmatpush1.msra.mxu0 0.0
    %576 = vmatprep.subr.mxu0 0.0
    %577 = vmatpush1.msra.mxu0 0.0
    %578 = vmatprep.subr.mxu0 0.0
    %579 = vmatpush1.msra.mxu0 0.0
    %580 = vmatprep.subr.mxu0 0.0
    %581 = vmatpush1.msra.mxu0 0.0
    %582 = vmatprep.subr.mxu0 0.0
    %583 = vmatpush1.msra.mxu0 0.0
    %584 = vmatprep.subr.mxu0 0.0
    %585 = vmatpush1.msra.mxu0 0.0
    %586 = vmatprep.mubr.f32.mxu0 0.0
    %587 = vmatmul.mubr.f32.gmra.mrb[0].mxu0 %v422
    %v588 = vpop.f32.mrb[0].mxu0
    %v589 = vadd.f32 0.0, %v588
    %v590 = vpop.f32.mrb[0].mxu0
    %v591 = vadd.f32 0.0, %v590
    %592 = vdwg.mxu0
    %v593 = vxor.u32 %v589, 2147483648
    %v594 = vxor.u32 %v591, 2147483648
    %v595 = vmul.f32 %v593, 1.442695
    %v596 = vpow.pop %v595
    %v597 = vmul.f32 %v594, 1.442695
    %v598 = vpow.pop %v597
    %v599 = vadd.f32 %v596, 1.0
    %v600 = vadd.f32 %v598, 1.0
    %v601 = vrcp.pop %v599
    %v602 = vmul.f32 1.0, %v601
    %v603 = vrcp.pop %v600
    %v604 = vmul.f32 1.0, %v603
    %v607 = vcombine.low %v602, %v604
    %s609 = scalar_lea.vmem [#allocation8], 8
    %610 = vst [vmem:[%s609] sm:$0xff] %v607
    // Predicated region
    $region34: #{tpu_custom_call.1} parent=1 // pred_check
      _
    $region35: #{tpu_custom_call.1} parent=1 // pred_check_branch
      %612 = sbr.rel (0) target = $region37
    $region36: #{tpu_custom_call.1} parent=1 // pred_region
      %s614 = ssub.s32 256, 256
      %615 = vsyncadd [#allocation5], %s614
      %s616 = sshll.u32 [#allocation8], 4
      %s617 = int_to_ptr.vmem [resolvable:$true] %s616
      %622 = dma.vmem_to_hbm [thread:$0]  %s617, 256, %s6, [#allocation5], 128, 128, 8
    $region37: #{tpu_custom_call.1} parent=1 // pred_fallthru
      _
    // Predicated region
    $region38: #{tpu_custom_call.1} parent=1 // pred_check
      _
    $region39: #{tpu_custom_call.1} parent=1 // pred_check_branch
      %624 = sbr.rel (0) target = $region41
    $region40: #{tpu_custom_call.1} parent=1 // pred_region
      %625 = dma.done [#allocation5], 256
    $region41: #{tpu_custom_call.1} parent=1 // pred_fallthru
      _
    %626 = vsyncpa [#allocation4], 1
    %627 = vsyncpa [#allocation7], 1
    %628 = vsyncpa [#allocation5], 1

</llo_original>
